<compile_context>
chip_gen: v6e
topology: v6e:2x2x1
jax: 0.10.0
libtpu: 0.0.40
codegen_flags: <defaults>
</compile_context>

<pallas_src>
import functools

import jax
import jax.numpy as jnp
from jax import lax
from jax.experimental import pallas as pl
from jax.experimental.pallas import tpu as pltpu


# ---------------------------------------------------------------------------
# Tiling helpers
# ---------------------------------------------------------------------------
def _round_up(x, m):
    return (x + m - 1) // m * m


def _choose_tile(size, target, align):
    """Return (tile, padded_size).

    Largest `align`-multiple divisor of `size` that is <= target; if none
    exists, pad `size` up to a multiple of an `align`-aligned `target` tile
    (pad instead of full-dimension fallback -> VMEM budget stays predictable
    on v7x's 64 MiB)."""
    if size <= target:
        return size, size                       # single full-dim block (always legal)
    t = (target // align) * align
    while t >= align:
        if size % t == 0:
            return t, size
        t -= align
    t = (target // align) * align
    return t, _round_up(size, t)


def _pick_head_group(n_heads, head_dim):
    """Smallest head group whose lane width is a multiple of 128 (unmasked,
    lane-dense slab loads/stores, e.g. head_dim=64 -> pairs); fall back to
    single heads (everything is sub-vreg anyway when dim < 128)."""
    for g in range(1, n_heads + 1):
        if n_heads % g == 0 and (g * head_dim) % 128 == 0:
            return g
    return 1


def _pick_batch_block(B, N, D, budget_bytes=12 * 1024 * 1024):
    """Batch elements per attention grid step: amortize per-step overhead with
    bigger contiguous DMAs while double-buffered qkv+out blocks stay inside a
    v7x-safe VMEM budget, and keep >= 2 parallel grid steps for megacore."""
    per_elem = N * 3 * D * 2 + N * D * 4        # bf16 qkv in + f32 out
    best = 1
    for bt in range(1, B + 1):
        if B % bt:
            continue
        if 2 * bt * per_elem > budget_bytes:    # x2 for double buffering
            continue
        if B >= 2 and B // bt < 2:              # leave work for both TCs (v7x)
            continue
        best = bt
    return best


# ---------------------------------------------------------------------------
# Kernel 1: tiled linear  y = x @ W + b   (qkv projection)
# ---------------------------------------------------------------------------
def _linear_kernel_noacc(x_ref, w_ref, b_ref, o_ref):
    # K fits a single tile: no K grid axis, no VMEM accumulator round trip.
    o_ref[...] = (jnp.dot(x_ref[...], w_ref[...],
                          preferred_element_type=jnp.float32)
                  + b_ref[...]).astype(o_ref.dtype)


def _linear_kernel_acc(x_ref, w_ref, b_ref, o_ref, acc_ref):
    @pl.when(pl.program_id(2) == 0)
    def _init():
        acc_ref[...] = jnp.zeros_like(acc_ref)

    acc_ref[...] += jnp.dot(x_ref[...], w_ref[...],
                            preferred_element_type=jnp.float32)

    @pl.when(pl.program_id(2) == pl.num_programs(2) - 1)
    def _finalize():
        o_ref[...] = (acc_ref[...] + b_ref[...]).astype(o_ref.dtype)


def linear(x2d, w, b, out_dtype, *, tm=256, tn=512, tk=1024):
    """x2d: (M, Din), w: (Din, Dout), b: (Dout,) -> (M, Dout) in out_dtype.

    bf16 MXU operands, f32 accumulation.  Dimensions are zero-padded to tile
    multiples when needed and the padding is sliced off afterwards."""
    M, Din = x2d.shape
    Dout = w.shape[1]

    xb = x2d.astype(jnp.bfloat16)
    wb = w.astype(jnp.bfloat16)
    bb = b.astype(jnp.float32)

    tm_, Mp = _choose_tile(M, tm, 128)
    if Mp > 512 and Mp % 512 == 0:
        tm_ = 512                                # >=512 blocks ~85% of HBM roofline
    tn_, Np = _choose_tile(Dout, tn, 128)
    tk_, Kp = _choose_tile(Din, tk, 128)

    if Mp != M:
        xb = jnp.pad(xb, ((0, Mp - M), (0, 0)))
    if Kp != Din:
        xb = jnp.pad(xb, ((0, 0), (0, Kp - Din)))
        wb = jnp.pad(wb, ((0, Kp - Din), (0, 0)))
    if Np != Dout:
        wb = jnp.pad(wb, ((0, 0), (0, Np - Dout)))
        bb = jnp.pad(bb, (0, Np - Dout))
    b2 = bb.reshape(1, Np)

    if Kp == tk_:
        # Single K tile -> 2-D grid, no accumulator scratch.
        out = pl.pallas_call(
            _linear_kernel_noacc,
            out_shape=jax.ShapeDtypeStruct((Mp, Np), out_dtype),
            grid_spec=pltpu.PrefetchScalarGridSpec(
                num_scalar_prefetch=0,
                grid=(Mp // tm_, Np // tn_),
                in_specs=[
                    pl.BlockSpec((tm_, tk_), lambda i, j: (i, 0)),
                    pl.BlockSpec((tk_, tn_), lambda i, j: (0, j)),
                    pl.BlockSpec((1, tn_), lambda i, j: (0, j)),
                ],
                out_specs=pl.BlockSpec((tm_, tn_), lambda i, j: (i, j)),
            ),
            compiler_params=pltpu.CompilerParams(
                dimension_semantics=("parallel", "parallel"),
                vmem_limit_bytes=32 * 1024 * 1024,   # v7x-safe scoped budget
            ),
        )(xb, wb, b2)
    else:
        out = pl.pallas_call(
            _linear_kernel_acc,
            out_shape=jax.ShapeDtypeStruct((Mp, Np), out_dtype),
            grid_spec=pltpu.PrefetchScalarGridSpec(
                num_scalar_prefetch=0,
                grid=(Mp // tm_, Np // tn_, Kp // tk_),
                in_specs=[
                    pl.BlockSpec((tm_, tk_), lambda i, j, k: (i, k)),
                    pl.BlockSpec((tk_, tn_), lambda i, j, k: (k, j)),
                    pl.BlockSpec((1, tn_), lambda i, j, k: (0, j)),
                ],
                out_specs=pl.BlockSpec((tm_, tn_), lambda i, j, k: (i, j)),
                scratch_shapes=[pltpu.VMEM((tm_, tn_), jnp.float32)],
            ),
            compiler_params=pltpu.CompilerParams(
                dimension_semantics=("parallel", "parallel", "arbitrary"),
                vmem_limit_bytes=32 * 1024 * 1024,
            ),
        )(xb, wb, b2)

    if Mp != M or Np != Dout:
        out = out[:M, :Dout]
    return out


# ---------------------------------------------------------------------------
# Kernel 2: fused attention + output projection.
#   qkv block : (Bt, N, 3*D) packed [q | k | v], head-major (softmax scale
#               already folded into the q columns of the qkv projection).
#   w_proj    : (D, D) bf16, same block every grid step -> VMEM-resident.
#   output    : (Bt, N, D) f32 written directly in (B, N, D) layout.
# ---------------------------------------------------------------------------
def _attn_proj_kernel(qkv_ref, wp_ref, bp_ref, o_ref, oattn_ref,
                      *, n_heads, head_dim, group):
    D = n_heads * head_dim
    gw = group * head_dim
    Bt = qkv_ref.shape[0]

    @pl.loop(0, Bt)
    def _per_batch(b):
        # Per head group: lane-aligned slab loads from the packed qkv block;
        # each group's result is stored into the (N, D) VMEM scratch as soon
        # as it is computed (bounds live ranges; no trailing concatenate over
        # all heads).
        for g in range(n_heads // group):
            lo = g * gw
            qg = qkv_ref[b, :, lo:lo + gw]                       # (N, gw) bf16
            kg = qkv_ref[b, :, D + lo:D + lo + gw]
            vg = qkv_ref[b, :, 2 * D + lo:2 * D + lo + gw]
            outs = []
            for hh in range(group):
                s0, s1 = hh * head_dim, (hh + 1) * head_dim
                # Contract on head_dim directly (no k transpose / relayout);
                # the softmax scale is already folded into the qkv weights.
                s = lax.dot_general(qg[:, s0:s1], kg[:, s0:s1],
                                    (((1,), (1,)), ((), ())),
                                    preferred_element_type=jnp.float32)  # (N, N) f32
                s = s - jnp.max(s, axis=-1, keepdims=True)
                p = jnp.exp(s)
                # approx reciprocal (EUP slot) is fine for bf16/f32-2e-2 use;
                # switch to an exact divide for f32 training use.
                p = p * pl.reciprocal(jnp.sum(p, axis=-1, keepdims=True),
                                      approx=True)
                o = lax.dot_general(p.astype(vg.dtype), vg[:, s0:s1],
                                    (((1,), (0,)), ((), ())),
                                    preferred_element_type=jnp.float32)  # (N, hd)
                outs.append(o.astype(jnp.bfloat16))
            slab = outs[0] if group == 1 else jnp.concatenate(outs, axis=-1)
            oattn_ref[:, lo:lo + gw] = slab        # one lane-slab store per group

        # Fused output projection for this batch element (W_proj VMEM-resident,
        # attention output never round-trips through HBM).
        o_ref[b] = (jnp.dot(oattn_ref[...], wp_ref[...],
                            preferred_element_type=jnp.float32)
                    + bp_ref[...]).astype(o_ref.dtype)
    # TODO(synk): for large N, switch to a flash-style kernel (online softmax,
    # streamed K/V tiles) instead of materializing the full NxN score matrix.
    # TODO(synk): for very small B on v7x, add a head-group grid axis (with an
    # accumulating projection) to feed both TensorCores.


def attention_fused(qkv, w_proj, b_proj, n_heads, out_dtype):
    """qkv: (B, N, 3*D) packed [q|k|v] head-major -> proj(attention) (B, N, D)."""
    B, N, D3 = qkv.shape
    D = D3 // 3
    head_dim = D // n_heads
    group = _pick_head_group(n_heads, head_dim)
    Bt = _pick_batch_block(B, N, D)

    kern = functools.partial(_attn_proj_kernel, n_heads=n_heads,
                             head_dim=head_dim, group=group)
    return pl.pallas_call(
        kern,
        out_shape=jax.ShapeDtypeStruct((B, N, D), out_dtype),
        grid_spec=pltpu.PrefetchScalarGridSpec(
            num_scalar_prefetch=0,
            grid=(B // Bt,),
            in_specs=[
                pl.BlockSpec((Bt, N, D3), lambda i: (i, 0, 0)),
                pl.BlockSpec((D, D), lambda i: (0, 0)),   # W_proj: same block -> resident
                pl.BlockSpec((1, D), lambda i: (0, 0)),
            ],
            out_specs=pl.BlockSpec((Bt, N, D), lambda i: (i, 0, 0)),
            scratch_shapes=[pltpu.VMEM((N, D), jnp.bfloat16)],
        ),
        compiler_params=pltpu.CompilerParams(
            dimension_semantics=("parallel",),
            vmem_limit_bytes=32 * 1024 * 1024,   # v7x-safe (64 MiB physical)
        ),
    )(qkv, w_proj.astype(jnp.bfloat16),
      b_proj.reshape(1, D).astype(jnp.float32))


# ---------------------------------------------------------------------------
# Attention module (parameters initialized deterministically in-script)
# ---------------------------------------------------------------------------
class Attention:
    def __init__(self, dim, n_heads=8, key=None):
        assert dim % n_heads == 0
        self.dim = dim
        self.n_heads = n_heads
        self.head_dim = dim // n_heads
        self.scale = self.head_dim ** (-0.5)
        key = jax.random.PRNGKey(0) if key is None else key
        k1, k2, k3, k4 = jax.random.split(key, 4)
        # f32 master weights, stored as (in, out) so y = x @ W + b (reference).
        self.w_qkv = jax.random.normal(k1, (dim, 3 * dim), jnp.float32) * 0.05
        self.b_qkv = jax.random.normal(k2, (3 * dim,), jnp.float32) * 0.05
        self.w_proj = jax.random.normal(k3, (dim, dim), jnp.float32) * 0.05
        self.b_proj = jax.random.normal(k4, (dim,), jnp.float32) * 0.05

        # One-time kernel parameter transforms:
        #  * softmax scale folded into the q columns of W_qkv / b_qkv
        #    (q' = scale * (x @ Wq + bq)), so the kernel applies no per-head scale;
        #  * MXU operand weights pre-cast to bf16 (biases stay f32).
        col_scale = jnp.concatenate(
            [jnp.full((dim,), self.scale, jnp.float32),
             jnp.ones((2 * dim,), jnp.float32)])
        self.w_qkv_k = (self.w_qkv * col_scale[None, :]).astype(jnp.bfloat16)
        self.b_qkv_k = self.b_qkv * col_scale
        self.w_proj_k = self.w_proj.astype(jnp.bfloat16)
        self.b_proj_k = self.b_proj

    def __call__(self, x):
        B, N, D = x.shape
        # qkv projection (tiled Pallas matmul, bf16 activations out).
        qkv = linear(x.reshape(B * N, D), self.w_qkv_k, self.b_qkv_k,
                     out_dtype=jnp.bfloat16)              # (B*N, 3D)
        # Pure reshape (no data movement): qkv split / head layout is handled
        # inside the attention kernel -> no XLA reshape/transpose round trip.
        qkv = qkv.reshape(B, N, 3 * D)

        # Attention + output projection fused in one kernel (W_proj resident
        # in VMEM, no HBM round trip for the attention output).
        # attn_drop / proj_drop have p = 0.0 -> identity in the forward pass.
        out = attention_fused(qkv, self.w_proj_k, self.b_proj_k,
                              self.n_heads, out_dtype=jnp.float32)
        return out
        # TODO(synk): on v5e, additionally fuse the qkv projection into the
        # attention kernel via pltpu.emit_pipeline to remove the remaining
        # qkv HBM round trip.


# ---------------------------------------------------------------------------
# Pure-JAX (f32) reference for sanity checking
# ---------------------------------------------------------------------------
def attention_ref(m, x):
    B, N, D = x.shape
    H, hd = m.n_heads, m.head_dim
    qkv = x @ m.w_qkv + m.b_qkv
    qkv = qkv.reshape(B, N, 3, H, hd).transpose(2, 0, 3, 1, 4)
    q, k, v = qkv[0], qkv[1], qkv[2]
    s = jnp.einsum("bhqd,bhkd->bhqk", q, k) * m.scale
    p = jax.nn.softmax(s, axis=-1)
    o = jnp.einsum("bhqk,bhkd->bhqd", p, v)
    o = o.transpose(0, 2, 1, 3).reshape(B, N, D)
    return o @ m.w_proj + m.b_proj


if __name__ == "__main__":
    key = jax.random.PRNGKey(0)
    kx, kp = jax.random.split(key)

    B, N, D, H = 2, 8, 48, 12            # dim=48, n_heads=12 -> head_dim=4
    x = jax.random.normal(kx, (B, N, D), jnp.float32)

    attn = Attention(dim=D, n_heads=H, key=kp)
    out = jax.block_until_ready(attn(x))

    ref = attention_ref(attn, x)
    assert out.shape == (B, N, D)
    # bf16 matmul operands (f32 accumulation) vs. the pure-f32 reference.
    assert jnp.allclose(out, ref, atol=2e-2, rtol=2e-2), "mismatch vs reference"

    print("KERNEL_OK")
</pallas_src>

<mosaic_0001>
module attributes {stable_mosaic.version = 11 : i64} {
  func.func @_linear_kernel_noacc(%arg0: i32, %arg1: i32, %arg2: memref<16x48xbf16, #tpu.memory_space<vmem>>, %arg3: memref<48x144xbf16, #tpu.memory_space<vmem>>, %arg4: memref<1x144xf32, #tpu.memory_space<vmem>>, %arg5: memref<16x144xbf16, #tpu.memory_space<vmem>>) attributes {dimension_semantics = [#tpu.dimension_semantics<parallel>, #tpu.dimension_semantics<parallel>], iteration_bounds = array<i64: 1, 1>, scalar_prefetch = 0 : i64, scratch_operands = 0 : i64, tpu.core_type = #tpu.core_type<tc>, window_params = [{transform_indices = @transform_0, window_bounds = array<i64: 16, 48>}, {transform_indices = @transform_1, window_bounds = array<i64: 48, 144>}, {transform_indices = @transform_2, window_bounds = array<i64: 1, 144>}, {transform_indices = @transform_3, window_bounds = array<i64: 16, 144>}]} {
    %c0 = arith.constant 0 : index
    %c0_0 = arith.constant 0 : index
    %0 = vector.load %arg2[%c0, %c0_0] : memref<16x48xbf16, #tpu.memory_space<vmem>>, vector<16x48xbf16>
    %c0_1 = arith.constant 0 : index
    %c0_2 = arith.constant 0 : index
    %1 = vector.load %arg3[%c0_1, %c0_2] : memref<48x144xbf16, #tpu.memory_space<vmem>>, vector<48x144xbf16>
    %cst = arith.constant dense<0.000000e+00> : vector<16x144xf32>
    %2 = tpu.matmul %0, %1, %cst {dimension_numbers = #tpu.dot_dimension_numbers<[1], [0], [0], [1], [0, 0, 1, 1], [], []>} : vector<16x48xbf16>, vector<48x144xbf16>, vector<16x144xf32> -> vector<16x144xf32>
    %c0_3 = arith.constant 0 : index
    %c0_4 = arith.constant 0 : index
    %3 = vector.load %arg4[%c0_3, %c0_4] : memref<1x144xf32, #tpu.memory_space<vmem>>, vector<1x144xf32>
    %4 = vector.broadcast %3 : vector<1x144xf32> to vector<16x144xf32>
    %5 = arith.addf %2, %4 : vector<16x144xf32>
    %6 = arith.truncf %5 : vector<16x144xf32> to vector<16x144xbf16>
    %c0_5 = arith.constant 0 : index
    %c0_6 = arith.constant 0 : index
    %7 = vector.load %arg5[%c0_5, %c0_6] : memref<16x144xbf16, #tpu.memory_space<vmem>>, vector<16x144xbf16>
    tpu.vector_store %arg5[%c0_5, %c0_6], %6 {strides = array<i32>} : memref<16x144xbf16, #tpu.memory_space<vmem>>, vector<16x144xbf16>,
    return
  }
  func.func @transform_0(%arg0: i32, %arg1: i32) -> (i32, i32) {
    %c0_i32 = arith.constant 0 : i32
    %c0_i32_0 = arith.constant 0 : i32
    return %arg0, %c0_i32 : i32, i32
  }
  func.func @transform_1(%arg0: i32, %arg1: i32) -> (i32, i32) {
    %c0_i32 = arith.constant 0 : i32
    %c0_i32_0 = arith.constant 0 : i32
    return %c0_i32, %arg1 : i32, i32
  }
  func.func @transform_2(%arg0: i32, %arg1: i32) -> (i32, i32) {
    %c0_i32 = arith.constant 0 : i32
    %c0_i32_0 = arith.constant 0 : i32
    return %c0_i32, %arg1 : i32, i32
  }
  func.func @transform_3(%arg0: i32, %arg1: i32) -> (i32, i32) {
    %c0_i32 = arith.constant 0 : i32
    return %arg0, %arg1 : i32, i32
  }
}

</mosaic_0001>

<llo_original>
// kernel: tpu_custom_call.1
$region0: #{tpu_custom_call.1}
  #allocation0 [shape = 'u32[]', space=smem, size = 0x4, offset = 0x4, fixed_abs, tag = 'smem constant byte address 0x4 - core index']
  #allocation1 [shape = 'u32[144,128]{1,0:T(1,128)}', space=vmem, size = 0x12000, scoped, tag = 'internal scratch']
  %s0 = inlined_call_operand.hbm [shape: bf16[16,48], index: 0, kind: input, shape index: {}]
  %s1 = inlined_call_operand.hbm [shape: bf16[48,144], index: 1, kind: input, shape index: {}]
  %s2 = inlined_call_operand.vmem [shape: f32[1,144], index: 2, kind: input, shape index: {}]
  %s3 = inlined_call_operand.hbm [shape: bf16[16,144], index: 3, kind: output, shape index: {}]
  %s4 = sld [smem:[#allocation0]]
  $region30: #{tpu_custom_call.1} parent=0
    _
  %s6 = ssub.s32 1, %s4
  %s7 = scalar_select 0, %s6, %s4
  $region1: #{tpu_custom_call.1} parent=0
    #allocation2 [shape = 'u8[4096]{0}', space=vmem, size = 0x1000, scoped, tag = 'input window, operand 0, single buffered']
    #allocation3 [shape = 's32[1]{0}', space=sflag, size = 0x4, scoped, tag = 'scoped memory for tpu_custom_call.1']
    #allocation4 [shape = 's32[1]{0}', space=sflag, size = 0x4, scoped, tag = 'scoped memory for tpu_custom_call.1']
    #allocation5 [shape = 'u8[24576]{0}', space=vmem, size = 0x6000, scoped, tag = 'input window, operand 1, single buffered']
    #allocation6 [shape = 's32[1]{0}', space=sflag, size = 0x4, scoped, tag = 'scoped memory for tpu_custom_call.1']
    #allocation7 [shape = 'u8[8192]{0}', space=vmem, size = 0x2000, scoped, tag = 'output window, operand 0, single buffered']
    %8 = vsyncpa [#allocation3], 0
    %9 = vsyncpa [#allocation6], 0
    %10 = vsyncpa [#allocation4], 0
    // Predicated region
    $region2: #{tpu_custom_call.1} parent=1 // pred_check
      _
    $region3: #{tpu_custom_call.1} parent=1 // pred_check_branch
      %12 = sbr.rel (0) target = $region5
    $region4: #{tpu_custom_call.1} parent=1 // pred_region
      %s14 = ssub.s32 128, 128
      %15 = vsyncadd [#allocation3], %s14
      %s16 = sshll.u32 [#allocation2], 4
      %s17 = int_to_ptr.vmem [resolvable:$true] %s16
      %22 = dma.hbm_to_vmem [thread:$0]  %s0, 128, %s17, [#allocation3], 64, 64, 4
    $region5: #{tpu_custom_call.1} parent=1 // pred_fallthru
      _
    // Predicated region
    $region6: #{tpu_custom_call.1} parent=1 // pred_check
      _
    $region7: #{tpu_custom_call.1} parent=1 // pred_check_branch
      %24 = sbr.rel (0) target = $region9
    $region8: #{tpu_custom_call.1} parent=1 // pred_region
      %s26 = ssub.s32 768, 768
      %27 = vsyncadd [#allocation6], %s26
      %s28 = sshll.u32 [#allocation5], 4
      %s29 = int_to_ptr.vmem [resolvable:$true] %s28
      %34 = dma.hbm_to_vmem [thread:$0]  %s1, 768, %s29, [#allocation6], 128, 128, 8
    $region9: #{tpu_custom_call.1} parent=1 // pred_fallthru
      _
    // Predicated region
    $region10: #{tpu_custom_call.1} parent=1 // pred_check
      _
    $region11: #{tpu_custom_call.1} parent=1 // pred_check_branch
      %36 = sbr.rel (0) target = $region13
    $region12: #{tpu_custom_call.1} parent=1 // pred_region
      _
    $region13: #{tpu_custom_call.1} parent=1 // pred_fallthru
      _
    // Predicated region
    $region14: #{tpu_custom_call.1} parent=1 // pred_check
      _
    $region15: #{tpu_custom_call.1} parent=1 // pred_check_branch
      %38 = sbr.rel (0) target = $region17
    $region16: #{tpu_custom_call.1} parent=1 // pred_region
      %39 = dma.done [#allocation3], 128
    $region17: #{tpu_custom_call.1} parent=1 // pred_fallthru
      _
    // Predicated region
    $region18: #{tpu_custom_call.1} parent=1 // pred_check
      _
    $region19: #{tpu_custom_call.1} parent=1 // pred_check_branch
      %41 = sbr.rel (0) target = $region21
    $region20: #{tpu_custom_call.1} parent=1 // pred_region
      %42 = dma.done [#allocation6], 768
    $region21: #{tpu_custom_call.1} parent=1 // pred_fallthru
      _
    %v44 = vld [vmem:[#allocation2] sm:$0xf]
    %v45 = vld [vmem:[#allocation2 + $0x4] sm:$0xf]
    %v46 = vld [vmem:[#allocation5] sm:$0xff]
    %v47 = vld [vmem:[#allocation5 + $0x8] sm:$0xff]
    %v48 = vld [vmem:[#allocation5 + $0x10] sm:$0xff]
    %v49 = vld [vmem:[#allocation5 + $0x18] sm:$0xff]
    %v50 = vld [vmem:[#allocation5 + $0x20] sm:$0xff]
    %v51 = vld [vmem:[#allocation5 + $0x28] sm:$0xff]
    %v52 = vld [vmem:[%s2] sm:$0x3]
    %v54 = vlaneseq
    %v55 = vshrl.u32 %v54, 7
    %v56 = vsub.s32 0, %v55
    %v57 = vrot.slane %v52, %v56
    %v58 = vlaneseq
    %v59 = vshrl.u32 %v58, 7
    %v60 = vsub.s32 1, %v59
    %v61 = vrot.slane %v52, %v60
    %v66 = vunpack.c.l.b16 %v44
    %v67 = vunpack.c.l.b16 %v45
    %v68 = vpack.c.b16 %v67, %v66
    %v75 = vunpack.c.l.b16 %v46
    %v76 = vunpack.c.h.b16 %v46
    %v77 = vunpack.c.l.b16 %v47
    %v78 = vunpack.c.h.b16 %v47
    %v79 = vunpack.c.l.b16 %v48
    %v80 = vunpack.c.h.b16 %v48
    %v81 = vunpack.c.l.b16 %v49
    %v82 = vunpack.c.h.b16 %v49
    %v83 = vunpack.c.l.b16 %v50
    %v84 = vunpack.c.h.b16 %v50
    %v85 = vunpack.c.l.b16 %v51
    %v86 = vunpack.c.h.b16 %v51
    %v87 = vpack.c.b16 %v77, %v75
    %v88 = vpack.c.b16 %v78, %v76
    %v89 = vpack.c.b16 %v81, %v79
    %v90 = vpack.c.b16 %v82, %v80
    %v91 = vpack.c.b16 %v85, %v83
    %v92 = vpack.c.b16 %v86, %v84
    %vm99 = vcmask 392192
    %v101 = vsel %vm99, %v68, 0
    %103 = vmatprep.subr.bf16.mxu0 0
    %104 = vmatpush1.bf16.msra.mxu0 0
    %105 = vmatprep.subr.bf16.mxu0 0
    %106 = vmatpush1.bf16.msra.mxu0 0
    %107 = vmatprep.subr.bf16.mxu0 0
    %108 = vmatpush1.bf16.msra.mxu0 0
    %109 = vmatprep.subr.bf16.mxu0 0
    %110 = vmatpush1.bf16.msra.mxu0 0
    %111 = vmatprep.subr.bf16.mxu0 0
    %112 = vmatpush1.bf16.msra.mxu0 0
    %113 = vmatprep.subr.bf16.mxu0 %v92
    %114 = vmatpush1.bf16.msra.mxu0 %v91
    %115 = vmatprep.subr.bf16.mxu0 %v90
    %116 = vmatpush1.bf16.msra.mxu0 %v89
    %117 = vmatprep.subr.bf16.mxu0 %v88
    %118 = vmatpush1.bf16.msra.mxu0 %v87
    %119 = vmatprep.subr.bf16.mxu0 0
    %120 = vmatpush2.bf16.msra.mxu0 0
    %121 = vmatprep.subr.bf16.mxu0 0
    %122 = vmatpush2.bf16.msra.mxu0 0
    %123 = vmatprep.subr.bf16.mxu0 0
    %124 = vmatpush2.bf16.msra.mxu0 0
    %125 = vmatprep.subr.bf16.mxu0 0
    %126 = vmatpush2.bf16.msra.mxu0 0
    %127 = vmatprep.subr.bf16.mxu0 0
    %128 = vmatpush2.bf16.msra.mxu0 0
    %129 = vmatprep.subr.bf16.mxu0 0
    %130 = vmatpush2.bf16.msra.mxu0 0
    %131 = vmatprep.subr.bf16.mxu0 0
    %132 = vmatpush2.bf16.msra.mxu0 0
    %133 = vmatprep.subr.bf16.mxu0 0
    %134 = vmatpush2.bf16.msra.mxu0 0
    %135 = vmatprep.mubr.bf16.mxu0 0
    %136 = vmatmul.mubr.bf16.gmra.mxu0 %v101
    %v137 = vpop.f32.mrf.mxu0
    %v138 = vadd.f32 %v57, %v137
    %v139 = vpop.f32.mrf.mxu0
    %v140 = vadd.f32 %v61, %v139
    %v141 = vpop.f32.mrf.mxu0
    %v142 = vadd.f32 %v57, %v141
    %v143 = vpop.f32.mrf.mxu0
    %v144 = vadd.f32 %v61, %v143
    %145 = vdwg.mxu0
    %v146 = vpack.c.bf16 %v142, %v138
    %v147 = vpack.c.bf16 %v144, %v140
    %v150 = vunpack.c.l.b16 %v146
    %v151 = vunpack.c.l.b16 %v147
    %v152 = vunpack.c.h.b16 %v146
    %v153 = vunpack.c.h.b16 %v147
    %v154 = vpack.c.b16 %v151, %v150
    %v155 = vpack.c.b16 %v153, %v152
    %vm158 = vcmask 1043456
    %vm159 = vcmask 130052
    %vm160 = vmor %vm159, %vm158
    %161 = vst.msk [vmem:[#allocation7] sm:$0xff] %vm160, %v154
    %162 = vst.msk [vmem:[#allocation7 + $0x8] sm:$0xff] %vm160, %v155
    // Predicated region
    $region22: #{tpu_custom_call.1} parent=1 // pred_check
      _
    $region23: #{tpu_custom_call.1} parent=1 // pred_check_branch
      %164 = sbr.rel (0) target = $region25
    $region24: #{tpu_custom_call.1} parent=1 // pred_region
      %s166 = ssub.s32 256, 256
      %167 = vsyncadd [#allocation4], %s166
      %s168 = sshll.u32 [#allocation7], 4
      %s169 = int_to_ptr.vmem [resolvable:$true] %s168
      %174 = dma.vmem_to_hbm [thread:$0]  %s169, 256, %s3, [#allocation4], 128, 128, 8
    $region25: #{tpu_custom_call.1} parent=1 // pred_fallthru
      _
    // Predicated region
    $region26: #{tpu_custom_call.1} parent=1 // pred_check
      _
    $region27: #{tpu_custom_call.1} parent=1 // pred_check_branch
      %176 = sbr.rel (0) target = $region29
    $region28: #{tpu_custom_call.1} parent=1 // pred_region
      %177 = dma.done [#allocation4], 256
    $region29: #{tpu_custom_call.1} parent=1 // pred_fallthru
      _
    %178 = vsyncpa [#allocation3], 1
    %179 = vsyncpa [#allocation6], 1
    %180 = vsyncpa [#allocation4], 1

</llo_original>
